<compile_context>
chip_gen: v7x
topology: tpu7x:2x2x1
jax: 0.10.0
libtpu: 0.0.40
codegen_flags: <defaults>
</compile_context>

<pallas_src>
import functools

import numpy as np
import jax
import jax.numpy as jnp
from jax.experimental import pallas as pl
from jax.experimental.pallas import tpu as pltpu


def _pad_to(n, m):
    return ((n + m - 1) // m) * m


# ---------------------------------------------------------------------------
# Encoder stand-in: 1x1 conv (channel-mixing matmul) + ReLU
# ---------------------------------------------------------------------------
def _encoder_kernel(x_ref, w_ref, b_ref, o_ref):
    x = x_ref[0]                                            # (Cin_pad, HWp)
    w = w_ref[...]                                          # (Cout, Cin_pad)
    y = jnp.dot(w, x, preferred_element_type=jnp.float32)   # MXU, K = Cin_pad >= 8
    y = y + b_ref[...]                                      # (Cout, 1) broadcast
    o_ref[0] = jnp.maximum(y, 0.0).astype(o_ref.dtype)


def encoder_standin(x_nchw, w, b):
    """Stand-in backbone.  Returns features kept flattened + lane-padded:
    (B, Cout, HW_pad) plus the valid spatial size."""
    B, Cin, H, W = x_nchw.shape
    Cout = w.shape[0]
    HW = H * W
    HWp = _pad_to(HW, 128)                  # lane-dense tiles (perf feedback)
    Cin_p = _pad_to(Cin, 8)                 # avoid K=3 MXU contraction (perf feedback)

    x = x_nchw.reshape(B, Cin, HW)
    x = jnp.pad(x, ((0, 0), (0, Cin_p - Cin), (0, HWp - HW)))
    w_p = jnp.pad(w, ((0, 0), (0, Cin_p - Cin)))
    b_col = b.reshape(Cout, 1)

    out = pl.pallas_call(
        _encoder_kernel,
        out_shape=jax.ShapeDtypeStruct((B, Cout, HWp), jnp.float32),
        grid=(B,),
        in_specs=[
            pl.BlockSpec((1, Cin_p, HWp), lambda i: (i, 0, 0)),
            pl.BlockSpec((Cout, Cin_p), lambda i: (0, 0)),
            pl.BlockSpec((Cout, 1), lambda i: (0, 0)),
        ],
        out_specs=pl.BlockSpec((1, Cout, HWp), lambda i: (i, 0, 0)),
        compiler_params=pltpu.CompilerParams(dimension_semantics=("parallel",)),
    )(x, w_p, b_col)
    return out, (H, W)


# ---------------------------------------------------------------------------
# Local head: AdaptiveAvgPool2d((15,15)) as a pooling matmul, fused with
# feature_L2_norm (eps added to sum-of-squares, per the PyTorch helper).
# ---------------------------------------------------------------------------
def _adaptive_pool_matrix(n_in, n_out):
    """P[i, j] = adaptive-avg-pool weight of input j for output i (PyTorch rule)."""
    p = np.zeros((n_out, n_in), dtype=np.float32)
    for i in range(n_out):
        s = (i * n_in) // n_out
        e = -((-(i + 1) * n_in) // n_out)   # ceil
        p[i, s:e] = 1.0 / (e - s)
    return p


def _local_head_kernel(f_ref, m_ref, o_ref):
    f = f_ref[0]                                                  # (C, HWp_in)
    m = m_ref[...]                                                # (HWp_in, HWp_out)
    y = jnp.dot(f, m, preferred_element_type=jnp.float32)         # adaptive avg pool
    ssq = jnp.sum(y * y, axis=0, keepdims=True)                   # (1, HWp_out)
    o_ref[0] = (y * jax.lax.rsqrt(ssq + 1e-6)).astype(o_ref.dtype)  # feature_L2_norm


def local_head(feats_flat, hw, out_hw=(15, 15)):
    B, C, HWp_in = feats_flat.shape
    H, W = hw
    Ho, Wo = out_hw
    HWo = Ho * Wo
    HWo_p = _pad_to(HWo, 128)               # 225 -> 256 lane-dense output

    ph = _adaptive_pool_matrix(H, Ho)       # (Ho, H)
    pw = _adaptive_pool_matrix(W, Wo)       # (Wo, W)
    m = np.kron(ph, pw)                     # (Ho*Wo, H*W); row = i*Wo+j, col = h*W+w
    m_t = np.zeros((HWp_in, HWo_p), dtype=np.float32)
    m_t[: H * W, :HWo] = m.T                # zero rows for padded input columns
    m_t = jnp.asarray(m_t)

    out = pl.pallas_call(
        _local_head_kernel,
        out_shape=jax.ShapeDtypeStruct((B, C, HWo_p), jnp.float32),
        grid=(B,),
        in_specs=[
            pl.BlockSpec((1, C, HWp_in), lambda i: (i, 0, 0)),
            pl.BlockSpec((HWp_in, HWo_p), lambda i: (0, 0)),
        ],
        out_specs=pl.BlockSpec((1, C, HWo_p), lambda i: (i, 0, 0)),
        compiler_params=pltpu.CompilerParams(dimension_semantics=("parallel",)),
    )(feats_flat, m_t)
    return out[:, :, :HWo].reshape(B, C, Ho, Wo)


# ---------------------------------------------------------------------------
# Global head (gem): L2Norm() + GeM() fused in one kernel per batch element.
# ---------------------------------------------------------------------------
def _gem_head_kernel(f_ref, p_ref, o_ref, *, hw_valid, hw_pad):
    f = f_ref[0]                                          # (C, HWp)
    p = p_ref[...]                                        # (1, 1) learnable exponent
    ssq = jnp.sum(f * f, axis=0, keepdims=True)           # (1, HWp)
    xn = f * jax.lax.rsqrt(ssq + 1e-6)                    # feature_L2_norm
    xc = jnp.maximum(xn, 1e-6)                            # clamp(min=eps)
    xp = jnp.exp(jnp.log(xc) * p)                         # x ** p
    if hw_valid != hw_pad:                                # mask lane padding (static)
        mask = jax.lax.broadcasted_iota(jnp.int32, xp.shape, 1) < hw_valid
        xp = jnp.where(mask, xp, 0.0)
    pooled = jnp.sum(xp, axis=1, keepdims=True) * (1.0 / hw_valid)   # full-map avg pool
    o_ref[0] = jnp.exp(jnp.log(pooled) * (1.0 / p)).astype(o_ref.dtype)  # ** (1/p)


def gem_head(feats_flat, hw, p):
    B, C, HWp = feats_flat.shape
    H, W = hw
    p_arr = jnp.asarray(p, jnp.float32).reshape(1, 1)
    kernel = functools.partial(_gem_head_kernel, hw_valid=H * W, hw_pad=HWp)
    out = pl.pallas_call(
        kernel,
        out_shape=jax.ShapeDtypeStruct((B, C, 1), jnp.float32),
        grid=(B,),
        in_specs=[
            pl.BlockSpec((1, C, HWp), lambda i: (i, 0, 0)),
            pl.BlockSpec((1, 1), lambda i: (0, 0)),
        ],
        out_specs=pl.BlockSpec((1, C, 1), lambda i: (i, 0, 0)),
        compiler_params=pltpu.CompilerParams(dimension_semantics=("parallel",)),
    )(feats_flat, p_arr)
    return out.reshape(B, C)


# ---------------------------------------------------------------------------
# Global head (netvlad): input normalization + 1x1-conv soft assignment +
# VLAD aggregation + intra/global L2 norms, fully fused per batch element.
# Both matmuls use standard MXU contractions (x is also supplied pre-transposed).
# ---------------------------------------------------------------------------
def _netvlad_kernel(x_ref, xt_ref, w_ref, c_ref, o_ref, *, hw_valid, hw_pad):
    x = x_ref[0]                                          # (D, HWp)
    xt = xt_ref[0]                                        # (HWp, D)
    w = w_ref[...]                                        # (K, D) 1x1-conv weight
    cen = c_ref[...]                                      # (K, D) centroids

    # F.normalize(x, p=2, dim=1)  (eps clamp folded into rsqrt(max(., eps^2)))
    inv = jax.lax.rsqrt(jnp.maximum(jnp.sum(x * x, axis=0, keepdims=True), 1e-24))
    xn = x * inv                                          # (D, HWp)
    inv_t = jax.lax.rsqrt(jnp.maximum(jnp.sum(xt * xt, axis=1, keepdims=True), 1e-24))
    xnt = xt * inv_t                                      # (HWp, D)

    # soft_assign = softmax over clusters of the 1x1 conv
    logits = jnp.dot(w, xn, preferred_element_type=jnp.float32)   # (K, HWp)
    mx = jnp.max(logits, axis=0, keepdims=True)
    e = jnp.exp(logits - mx)
    a = e / jnp.sum(e, axis=0, keepdims=True)                     # (K, HWp)
    if hw_valid != hw_pad:                                        # drop padded columns
        mask = jax.lax.broadcasted_iota(jnp.int32, a.shape, 1) < hw_valid
        a = jnp.where(mask, a, 0.0)

    # vlad[k,d] = sum_hw a[k,hw] * (xn[d,hw] - cen[k,d])
    asum = jnp.sum(a, axis=1, keepdims=True)                                  # (K, 1)
    vlad = jnp.dot(a, xnt, preferred_element_type=jnp.float32) - cen * asum   # (K, D)

    # intra-normalization over D, then global L2 over the flattened (K*D) vector
    n2 = jnp.sum(vlad * vlad, axis=1, keepdims=True)                          # (K, 1)
    vlad = vlad * jax.lax.rsqrt(jnp.maximum(n2, 1e-24))
    tot = jnp.sum(jnp.sum(vlad * vlad, axis=1, keepdims=True), axis=0, keepdims=True)
    o_ref[0] = (vlad * jax.lax.rsqrt(jnp.maximum(tot, 1e-24))).astype(o_ref.dtype)


def netvlad_head(feats_flat, hw, conv_w, centroids):
    B, D, HWp = feats_flat.shape
    H, W = hw
    K = conv_w.shape[0]
    feats_t = jnp.transpose(feats_flat, (0, 2, 1))   # (B, HWp, D): MXU-friendly RHS
    kernel = functools.partial(_netvlad_kernel, hw_valid=H * W, hw_pad=HWp)
    out = pl.pallas_call(
        kernel,
        out_shape=jax.ShapeDtypeStruct((B, K, D), jnp.float32),
        grid=(B,),
        in_specs=[
            pl.BlockSpec((1, D, HWp), lambda i: (i, 0, 0)),
            pl.BlockSpec((1, HWp, D), lambda i: (i, 0, 0)),
            pl.BlockSpec((K, D), lambda i: (0, 0)),
            pl.BlockSpec((K, D), lambda i: (0, 0)),
        ],
        out_specs=pl.BlockSpec((1, K, D), lambda i: (i, 0, 0)),
        compiler_params=pltpu.CompilerParams(dimension_semantics=("parallel",)),
    )(feats_flat, feats_t, conv_w, centroids)
    return out.reshape(B, K * D)


# ---------------------------------------------------------------------------
# FeaturesExtractor (mirrors the PyTorch forward dispatcher)
# ---------------------------------------------------------------------------
class FeaturesExtractor:
    def __init__(self, encoder_params, pooling='gem', gem_p=3.0, netvlad_params=None):
        # TODO(synk): encoder_params stand in for the pretrained torchvision backbone.
        self.encoder_params = encoder_params          # (w_enc, b_enc)
        self.pooling = pooling
        self.gem_p = gem_p
        self.netvlad_params = netvlad_params          # (conv_w, centroids)

    def forward(self, x, f_type='local'):
        feats_flat, hw = encoder_standin(x, *self.encoder_params)
        if f_type == 'local':
            return local_head(feats_flat, hw)         # avgpool(15,15) + feature_L2_norm
        elif f_type == 'global':
            if self.pooling == 'gem':
                return gem_head(feats_flat, hw, self.gem_p)        # L2Norm() + GeM()
            elif self.pooling == 'netvlad':
                return netvlad_head(feats_flat, hw, *self.netvlad_params)
            raise ValueError(f'Invalid pooling: {self.pooling}')
        else:
            raise ValueError(f'Invalid features type: {f_type}')


# ---------------------------------------------------------------------------
# Pure-JAX references (for correctness checks)
# ---------------------------------------------------------------------------
_HI = jax.lax.Precision.HIGHEST


def _ref_encoder(x, w, b):
    y = jnp.einsum('oc,bchw->bohw', w, x, precision=_HI) + b.reshape(1, -1, 1, 1)
    return jax.nn.relu(y)


def _ref_feature_L2_norm(f):
    norm = jnp.sqrt(jnp.sum(f * f, axis=1, keepdims=True) + 1e-6)
    return f / norm


def _ref_local(feats, out_hw=(15, 15)):
    B, C, H, W = feats.shape
    ph = jnp.asarray(_adaptive_pool_matrix(H, out_hw[0]))
    pw = jnp.asarray(_adaptive_pool_matrix(W, out_hw[1]))
    pooled = jnp.einsum('bchw,ih,jw->bcij', feats, ph, pw, precision=_HI)
    return _ref_feature_L2_norm(pooled)


def _ref_gem(feats, p, eps=1e-6):
    xn = _ref_feature_L2_norm(feats)
    xp = jnp.power(jnp.maximum(xn, eps), p)
    pooled = jnp.mean(xp, axis=(2, 3))
    return jnp.power(pooled, 1.0 / p)


def _ref_netvlad(feats, conv_w, centroids):
    B, D, H, W = feats.shape
    K = conv_w.shape[0]
    norm = jnp.maximum(jnp.sqrt(jnp.sum(feats * feats, axis=1, keepdims=True)), 1e-12)
    xn = feats / norm
    logits = jnp.einsum('kd,bdhw->bkhw', conv_w, xn, precision=_HI).reshape(B, K, -1)
    a = jax.nn.softmax(logits, axis=1)
    xf = xn.reshape(B, D, -1)
    vlad = (jnp.einsum('bkh,bdh->bkd', a, xf, precision=_HI)
            - centroids[None] * jnp.sum(a, axis=-1)[..., None])
    vlad = vlad / jnp.maximum(jnp.linalg.norm(vlad, axis=2, keepdims=True), 1e-12)
    vlad = vlad.reshape(B, -1)
    return vlad / jnp.maximum(jnp.linalg.norm(vlad, axis=1, keepdims=True), 1e-12)


if __name__ == "__main__":
    # Small shapes consistent with the module (real net: D=256..1024, 15x15 local maps)
    B, Cin, H, W = 2, 3, 16, 16       # RGB input images
    D = 32                            # stand-in encoder output channels
    K = 8                             # NetVLAD clusters (small test size)

    key = jax.random.PRNGKey(0)
    k1, k2, k3, k4, k5 = jax.random.split(key, 5)
    x = jax.random.normal(k1, (B, Cin, H, W), dtype=jnp.float32)
    w_enc = jax.random.normal(k2, (D, Cin), dtype=jnp.float32) * 0.3
    b_enc = jax.random.normal(k3, (D,), dtype=jnp.float32) * 0.1
    conv_w = jax.random.normal(k4, (K, D), dtype=jnp.float32) * 0.2
    centroids = jax.random.normal(k5, (K, D), dtype=jnp.float32) * 0.5

    net_gem = FeaturesExtractor((w_enc, b_enc), pooling='gem', gem_p=3.0)
    net_vlad = FeaturesExtractor((w_enc, b_enc), pooling='netvlad',
                                 netvlad_params=(conv_w, centroids))

    local = jax.block_until_ready(net_gem.forward(x, f_type='local'))
    g_gem = jax.block_until_ready(net_gem.forward(x, f_type='global'))
    g_vlad = jax.block_until_ready(net_vlad.forward(x, f_type='global'))

    # References
    feats_ref = _ref_encoder(x, w_enc, b_enc)
    local_ref = _ref_local(feats_ref)
    gem_ref = _ref_gem(feats_ref, 3.0)
    vlad_ref = _ref_netvlad(feats_ref, conv_w, centroids)

    assert local.shape == (B, D, 15, 15)
    assert g_gem.shape == (B, D)
    assert g_vlad.shape == (B, K * D)
    assert jnp.allclose(local, local_ref, rtol=1e-3, atol=1e-4), \
        f"local max err {float(jnp.max(jnp.abs(local - local_ref)))}"
    assert jnp.allclose(g_gem, gem_ref, rtol=1e-3, atol=1e-4), \
        f"gem max err {float(jnp.max(jnp.abs(g_gem - gem_ref)))}"
    assert jnp.allclose(g_vlad, vlad_ref, rtol=1e-3, atol=1e-4), \
        f"netvlad max err {float(jnp.max(jnp.abs(g_vlad - vlad_ref)))}"

    print("KERNEL_OK")
</pallas_src>

<mosaic_0001>
module attributes {stable_mosaic.version = 11 : i64} {
  func.func @_encoder_kernel(%arg0: i32, %arg1: memref<1x8x256xf32, #tpu.memory_space<vmem>>, %arg2: memref<32x8xf32, #tpu.memory_space<vmem>>, %arg3: memref<32x1xf32, #tpu.memory_space<vmem>>, %arg4: memref<1x32x256xf32, #tpu.memory_space<vmem>>) attributes {dimension_semantics = [#tpu.dimension_semantics<parallel>], iteration_bounds = array<i64: 2>, scalar_prefetch = 0 : i64, scratch_operands = 0 : i64, tpu.core_type = #tpu.core_type<tc>, window_params = [{transform_indices = @transform_0, window_bounds = array<i64: 1, 8, 256>}, {pipeline_mode = #tpu.pipeline_mode<synchronous>, transform_indices = @transform_1, window_bounds = array<i64: 32, 8>}, {pipeline_mode = #tpu.pipeline_mode<synchronous>, transform_indices = @transform_2, window_bounds = array<i64: 32, 1>}, {transform_indices = @transform_3, window_bounds = array<i64: 1, 32, 256>}]} {
    %c0 = arith.constant 0 : index
    %c0_0 = arith.constant 0 : index
    %c0_1 = arith.constant 0 : index
    %0 = vector.load %arg1[%c0, %c0_0, %c0_1] : memref<1x8x256xf32, #tpu.memory_space<vmem>>, vector<1x8x256xf32>
    %1 = vector.shape_cast %0 : vector<1x8x256xf32> to vector<8x256xf32>
    %c0_2 = arith.constant 0 : index
    %c0_3 = arith.constant 0 : index
    %2 = vector.load %arg2[%c0_2, %c0_3] : memref<32x8xf32, #tpu.memory_space<vmem>>, vector<32x8xf32>
    %cst = arith.constant dense<0.000000e+00> : vector<32x256xf32>
    %3 = tpu.matmul %2, %1, %cst {dimension_numbers = #tpu.dot_dimension_numbers<[1], [0], [0], [1], [0, 0, 1, 1], [], []>} : vector<32x8xf32>, vector<8x256xf32>, vector<32x256xf32> -> vector<32x256xf32>
    %c0_4 = arith.constant 0 : index
    %c0_5 = arith.constant 0 : index
    %4 = vector.load %arg3[%c0_4, %c0_5] : memref<32x1xf32, #tpu.memory_space<vmem>>, vector<32x1xf32>
    %5 = vector.broadcast %4 : vector<32x1xf32> to vector<32x256xf32>
    %6 = arith.addf %3, %5 : vector<32x256xf32>
    %cst_6 = arith.constant 0.000000e+00 : f32
    %7 = vector.broadcast %cst_6 : f32 to vector<32x256xf32>
    %8 = arith.maximumf %6, %7 : vector<32x256xf32>
    %c0_7 = arith.constant 0 : index
    %c0_8 = arith.constant 0 : index
    %c0_9 = arith.constant 0 : index
    %9 = vector.load %arg4[%c0_7, %c0_8, %c0_9] : memref<1x32x256xf32, #tpu.memory_space<vmem>>, vector<1x32x256xf32>
    %10 = vector.shape_cast %9 : vector<1x32x256xf32> to vector<32x256xf32>
    %11 = vector.shape_cast %8 : vector<32x256xf32> to vector<1x32x256xf32>
    tpu.vector_store %arg4[%c0_7, %c0_8, %c0_9], %11 {strides = array<i32>} : memref<1x32x256xf32, #tpu.memory_space<vmem>>, vector<1x32x256xf32>,
    return
  }
  func.func @transform_0(%arg0: i32) -> (i32, i32, i32) {
    %c0_i32 = arith.constant 0 : i32
    %c0_i32_0 = arith.constant 0 : i32
    %c0_i32_1 = arith.constant 0 : i32
    return %arg0, %c0_i32, %c0_i32_0 : i32, i32, i32
  }
  func.func @transform_1(%arg0: i32) -> (i32, i32) {
    %c0_i32 = arith.constant 0 : i32
    %c0_i32_0 = arith.constant 0 : i32
    %c0_i32_1 = arith.constant 0 : i32
    return %c0_i32, %c0_i32_0 : i32, i32
  }
  func.func @transform_2(%arg0: i32) -> (i32, i32) {
    %c0_i32 = arith.constant 0 : i32
    %c0_i32_0 = arith.constant 0 : i32
    %c0_i32_1 = arith.constant 0 : i32
    return %c0_i32, %c0_i32_0 : i32, i32
  }
  func.func @transform_3(%arg0: i32) -> (i32, i32, i32) {
    %c0_i32 = arith.constant 0 : i32
    %c0_i32_0 = arith.constant 0 : i32
    %c0_i32_1 = arith.constant 0 : i32
    return %arg0, %c0_i32, %c0_i32_0 : i32, i32, i32
  }
}

</mosaic_0001>

<llo_original>
// kernel: tpu_custom_call.1
$region0: #{tpu_custom_call.1}
  #allocation0 [shape = 'u32[]', space=smem, size = 0x4, offset = 0x4, fixed_abs, tag = 'smem constant byte address 0x4 - core index']
  #allocation1 [shape = 'u32[144,128]{1,0:T(1,128)}', space=vmem, size = 0x12000, scoped, tag = 'internal scratch']
  %s0 = inlined_call_operand.vmem [shape: f32[2,8,256], index: 0, kind: input, shape index: {}]
  %s1 = inlined_call_operand.vmem [shape: f32[32,8], index: 1, kind: input, shape index: {}]
  %s2 = inlined_call_operand.vmem [shape: f32[32,1], index: 2, kind: input, shape index: {}]
  %s3 = inlined_call_operand.hbm [shape: f32[2,32,256], index: 3, kind: output, shape index: {}]
  %s4 = sld [smem:[#allocation0]]
  $region45: #{tpu_custom_call.1} parent=0
    _
  %s6 = ssub.s32 1, %s4
  %s7 = scalar_select 0, %s6, %s4
  $region1: #{tpu_custom_call.1} parent=0
    #allocation2 [shape = 'u8[65536]{0}', space=vmem, size = 0x10000, scoped, tag = 'output window, operand 0']
    #allocation3 [shape = 's32[2]{0}', space=sflag, size = 0x8, scoped, tag = 'scoped memory for tpu_custom_call.1']
    %8 = vsyncpa [#allocation3], 0
    %s9 = scalar_lea.sflag [#allocation3], 1
    %10 = vsyncpa %s9, 0
    loop: start=0, step=1, limit=4
    $region2: #{tpu_custom_call.1} parent=1 // loop_pre_header
      _
    $region3: #{tpu_custom_call.1} parent=1 // loop_header
      %s12 = sphi 0, %s16
      %p13 = scmp.ge.s32.totalorder %s12, 4
      %s22 = sphi 0, %s24
      %s25 = sphi 0, %s22
      %s26 = sphi 0, %s25
      %s42 = sphi 0, %s26
      %s46 = sphi 0, %s46
      %s48 = sphi 0, %s46
      %s49 = sphi 0, %s48
      %s63 = sphi 0, %s49
      %s67 = sphi 0, %s67
      %s69 = sphi 0, %s67
      %s70 = sphi 0, %s69
      %s84 = sphi 0, %s70
      %s90 = sphi 0, %s92
      %s93 = sphi 0, %s90
      %s94 = sphi 0, %s93
      %s110 = sphi 0, %s94
    $region4: #{tpu_custom_call.1} parent=1 // loop_header_branch
      %15 = sbr.rel (%p13) target = $region8
    $region5: #{tpu_custom_call.1} parent=1 // loop_body
      %s17 = ssub.s32 %s12, 1
      %s18 = ssub.s32 %s12, 2
      %s19 = sadd.s32 %s12, 1
      %s20 = ssub.s32 %s12, %s19
      %p21 = scmp.eq.s32.totalorder %s20, 0
      %s23 = sadd.s32 %s22, 1
      %s24 = scalar_select %p21, %s22, %s23
      %p27 = pneg %p21
      %p28 = scmp.eq.s32.totalorder %s12, 1
      %p29 = por %p27, %p28
      %p30 = scmp.ne.s32.totalorder %s22, %s25
      %p31 = scmp.eq.s32.totalorder %s12, 0
      %p32 = por %p30, %p31
      %p33 = scmp.ne.s32.totalorder %s22, %s25
      %p34 = scmp.eq.s32.totalorder %s17, 1
      %p35 = por %p33, %p34
      %p36 = scmp.ne.s32.totalorder %s25, %s26
      %p37 = scmp.eq.s32.totalorder %s17, 0
      %p38 = por %p36, %p37
      %p39 = scmp.ne.s32.totalorder %s25, %s26
      %p40 = scmp.eq.s32.totalorder %s18, 1
      %p41 = por %p39, %p40
      %p43 = scmp.ne.s32.totalorder %s26, %s42
      %p44 = scmp.eq.s32.totalorder %s18, 0
      %p45 = por %p43, %p44
      %s47 = sadd.s32 %s46, 1
      %p50 = scmp.eq.s32.totalorder %s12, 1
      %p51 = scmp.ne.s32.totalorder %s46, %s48
      %p52 = scmp.eq.s32.totalorder %s12, 0
      %p53 = por %p51, %p52
      %p54 = scmp.ne.s32.totalorder %s46, %s48
      %p55 = scmp.eq.s32.totalorder %s17, 1
      %p56 = por %p54, %p55
      %p57 = scmp.ne.s32.totalorder %s48, %s49
      %p58 = scmp.eq.s32.totalorder %s17, 0
      %p59 = por %p57, %p58
      %p60 = scmp.ne.s32.totalorder %s48, %s49
      %p61 = scmp.eq.s32.totalorder %s18, 1
      %p62 = por %p60, %p61
      %p64 = scmp.ne.s32.totalorder %s49, %s63
      %p65 = scmp.eq.s32.totalorder %s18, 0
      %p66 = por %p64, %p65
      %s68 = sadd.s32 %s67, 1
      %p71 = scmp.eq.s32.totalorder %s12, 1
      %p72 = scmp.ne.s32.totalorder %s67, %s69
      %p73 = scmp.eq.s32.totalorder %s12, 0
      %p74 = por %p72, %p73
      %p75 = scmp.ne.s32.totalorder %s67, %s69
      %p76 = scmp.eq.s32.totalorder %s17, 1
      %p77 = por %p75, %p76
      %p78 = scmp.ne.s32.totalorder %s69, %s70
      %p79 = scmp.eq.s32.totalorder %s17, 0
      %p80 = por %p78, %p79
      %p81 = scmp.ne.s32.totalorder %s69, %s70
      %p82 = scmp.eq.s32.totalorder %s18, 1
      %p83 = por %p81, %p82
      %p85 = scmp.ne.s32.totalorder %s70, %s84
      %p86 = scmp.eq.s32.totalorder %s18, 0
      %p87 = por %p85, %p86
      %s88 = ssub.s32 %s12, %s19
      %p89 = scmp.eq.s32.totalorder %s88, 0
      %s91 = sadd.s32 %s90, 1
      %s92 = scalar_select %p89, %s90, %s91
      %p95 = pneg %p89
      %p96 = scmp.eq.s32.totalorder %s12, 1
      %p97 = por %p95, %p96
      %p98 = scmp.ne.s32.totalorder %s90, %s93
      %p99 = scmp.eq.s32.totalorder %s12, 0
      %p100 = por %p98, %p99
      %p101 = scmp.ne.s32.totalorder %s90, %s93
      %p102 = scmp.eq.s32.totalorder %s17, 1
      %p103 = por %p101, %p102
      %p104 = scmp.ne.s32.totalorder %s93, %s94
      %p105 = scmp.eq.s32.totalorder %s17, 0
      %p106 = por %p104, %p105
      %p107 = scmp.ne.s32.totalorder %s93, %s94
      %p108 = scmp.eq.s32.totalorder %s18, 1
      %p109 = por %p107, %p108
      %p111 = scmp.ne.s32.totalorder %s94, %s110
      %p112 = scmp.eq.s32.totalorder %s18, 0
      %p113 = por %p111, %p112
      %p114 = scmp.le.s32.totalorder 1, %s12
      %p115 = scmp.lt.s32.totalorder %s12, 3
      %p116 = pnand %p114, %p115
      %p117 = pneg %p116
      // Predicated region
      $region9: #{tpu_custom_call.1} parent=5 // pred_check
        _
      $region10: #{tpu_custom_call.1} parent=5 // pred_check_branch
        %119 = sbr.rel (%p116) target = $region12
      $region11: #{tpu_custom_call.1} parent=5 // pred_region
        %s120 = ssub.s32 %s12, 1
        // Predicated region
        $region13: #{tpu_custom_call.1} parent=11 // pred_check
          %p121 = pneg %p59
        $region14: #{tpu_custom_call.1} parent=11 // pred_check_branch
          %123 = sbr.rel (%p121) target = $region16
        $region15: #{tpu_custom_call.1} parent=11 // pred_region
          _
        $region16: #{tpu_custom_call.1} parent=11 // pred_fallthru
          _
        // Predicated region
        $region17: #{tpu_custom_call.1} parent=11 // pred_check
          %p124 = pneg %p80
        $region18: #{tpu_custom_call.1} parent=11 // pred_check_branch
          %126 = sbr.rel (%p124) target = $region20
        $region19: #{tpu_custom_call.1} parent=11 // pred_region
          _
        $region20: #{tpu_custom_call.1} parent=11 // pred_fallthru
          _
      $region12: #{tpu_custom_call.1} parent=5 // pred_fallthru
        _
      %p127 = scmp.lt.s32.totalorder %s12, 2
      // Predicated region
      $region21: #{tpu_custom_call.1} parent=5 // pred_check
        %p128 = pneg %p127
      $region22: #{tpu_custom_call.1} parent=5 // pred_check_branch
        %130 = sbr.rel (%p128) target = $region24
      $region23: #{tpu_custom_call.1} parent=5 // pred_region
        // Predicated region
        $region25: #{tpu_custom_call.1} parent=23 // pred_check
          %p131 = pneg %p32
        $region26: #{tpu_custom_call.1} parent=23 // pred_check_branch
          %133 = sbr.rel (%p131) target = $region28
        $region27: #{tpu_custom_call.1} parent=23 // pred_region
          %p134 = scmp.lt.s32.totalorder %s12, 1
          %s135 = scalar_select %p134, %s12, 1
          %s136 = smul.addr %s135, 2
          %s137 = smul.addr %s136, 8
          %s138 = scalar_lea.vmem %s0, %s137
        $region28: #{tpu_custom_call.1} parent=23 // pred_fallthru
          _
      $region24: #{tpu_custom_call.1} parent=5 // pred_fallthru
        _
      %p139 = scmp.le.s32.totalorder 1, %s12
      %p140 = scmp.lt.s32.totalorder %s12, 3
      %p141 = pnand %p139, %p140
      %p142 = pneg %p141
      // Predicated region
      $region29: #{tpu_custom_call.1} parent=5 // pred_check
        _
      $region30: #{tpu_custom_call.1} parent=5 // pred_check_branch
        %144 = sbr.rel (%p141) target = $region32
      $region31: #{tpu_custom_call.1} parent=5 // pred_region
        %s145 = ssub.s32 %s12, 1
        %p146 = scmp.lt.s32.totalorder %s17, 1
        %s147 = scalar_select %p146, %s17, 1
        %s148 = smul.addr %s147, 2
        %s149 = smul.addr %s148, 8
        %s150 = scalar_lea.vmem %s0, %s149
        %p151 = pneg %p38
        %p152 = pneg %p35
        %p153 = pneg %p59
        %p154 = pneg %p56
        %p155 = pneg %p80
        %p156 = pneg %p77
        %p157 = pneg %p106
        %p158 = pneg %p103
        %s159 = sand.u32 %s93, 1
        %s160 = scalar_lea.sflag [#allocation3], %s159
        %s161 = sand.u32 %s93, 1
        %s162 = smul.addr %s161, 64
        %s163 = scalar_lea.vmem [#allocation2], %s162
        %p164 = scmp.lt.s32.totalorder %s17, 1
        %s165 = scalar_select %p164, %s17, 1
        %s166 = smul.addr %s165, 2
        %s167 = smul.addr %s166, 8
        %s168 = scalar_lea.vmem %s0, %s167
        %v169 = vld [vmem:[%s168] sm:$0xff]
        %v170 = vld [vmem:[%s168 + $0x8] sm:$0xff]
        %v171 = vld [vmem:[%s1] sm:$0xff]
        %v172 = vld [vmem:[%s1 + $0x8] sm:$0xff]
        %v173 = vld [vmem:[%s1 + $0x10] sm:$0xff]
        %v174 = vld [vmem:[%s1 + $0x18] sm:$0xff]
        %v175 = vld [vmem:[%s2] sm:$0xff]
        %v176 = vld [vmem:[%s2 + $0x8] sm:$0xff]
        %v177 = vld [vmem:[%s2 + $0x10] sm:$0xff]
        %v178 = vld [vmem:[%s2 + $0x18] sm:$0xff]
        %180 = vset.pattern.permute.xlu0 0
        %181 = vperm.xlu0 %180, %v175
        %v182 = vpop.permute.xlu0 %181
        %185 = vset.pattern.permute.xlu0 0
        %186 = vperm.xlu0 %185, %v176
        %v187 = vpop.permute.xlu0 %186
        %190 = vset.pattern.permute.xlu0 0
        %191 = vperm.xlu0 %190, %v177
        %v192 = vpop.permute.xlu0 %191
        %195 = vset.pattern.permute.xlu0 0
        %196 = vperm.xlu0 %195, %v178
        %v197 = vpop.permute.xlu0 %196
        %vm199 = vcmask 64512
        %v201 = vsel %vm199, %v171, 0
        %v204 = vsel %vm199, %v172, 0
        %v207 = vsel %vm199, %v173, 0
        %v210 = vsel %vm199, %v174, 0
        %212 = vmatprep.subr.mxu0 %v170
        %213 = vmatpush1.msra.mxu0 %v169
        %214 = vmatprep.subr.mxu0 0.0
        %215 = vmatpush1.msra.mxu0 0.0
        %216 = vmatprep.subr.mxu0 0.0
        %217 = vmatpush1.msra.mxu0 0.0
        %218 = vmatprep.subr.mxu0 0.0
        %219 = vmatpush1.msra.mxu0 0.0
        %220 = vmatprep.subr.mxu0 0.0
        %221 = vmatpush1.msra.mxu0 0.0
        %222 = vmatprep.subr.mxu0 0.0
        %223 = vmatpush1.msra.mxu0 0.0
        %224 = vmatprep.subr.mxu0 0.0
        %225 = vmatpush1.msra.mxu0 0.0
        %226 = vmatprep.subr.mxu0 0.0
        %227 = vmatpush1.msra.mxu0 0.0
        %228 = vmatprep.subr.mxu0 0.0
        %229 = vmatpush1.msra.mxu0 0.0
        %230 = vmatprep.subr.mxu0 0.0
        %231 = vmatpush1.msra.mxu0 0.0
        %232 = vmatprep.subr.mxu0 0.0
        %233 = vmatpush1.msra.mxu0 0.0
        %234 = vmatprep.subr.mxu0 0.0
        %235 = vmatpush1.msra.mxu0 0.0
        %236 = vmatprep.subr.mxu0 0.0
        %237 = vmatpush1.msra.mxu0 0.0
        %238 = vmatprep.subr.mxu0 0.0
        %239 = vmatpush1.msra.mxu0 0.0
        %240 = vmatprep.subr.mxu0 0.0
        %241 = vmatpush1.msra.mxu0 0.0
        %242 = vmatprep.subr.mxu0 0.0
        %243 = vmatpush1.msra.mxu0 0.0
        %244 = vmatprep.subr.mxu0 0.0
        %245 = vmatpush1.msra.mxu0 0.0
        %246 = vmatprep.subr.mxu0 0.0
        %247 = vmatpush1.msra.mxu0 0.0
        %248 = vmatprep.subr.mxu0 0.0
        %249 = vmatpush1.msra.mxu0 0.0
        %250 = vmatprep.subr.mxu0 0.0
        %251 = vmatpush1.msra.mxu0 0.0
        %252 = vmatprep.subr.mxu0 0.0
        %253 = vmatpush1.msra.mxu0 0.0
        %254 = vmatprep.subr.mxu0 0.0
        %255 = vmatpush1.msra.mxu0 0.0
        %256 = vmatprep.subr.mxu0 0.0
        %257 = vmatpush1.msra.mxu0 0.0
        %258 = vmatprep.subr.mxu0 0.0
        %259 = vmatpush1.msra.mxu0 0.0
        %260 = vmatprep.subr.mxu0 0.0
        %261 = vmatpush1.msra.mxu0 0.0
        %262 = vmatprep.subr.mxu0 0.0
        %263 = vmatpush1.msra.mxu0 0.0
        %264 = vmatprep.subr.mxu0 0.0
        %265 = vmatpush1.msra.mxu0 0.0
        %266 = vmatprep.subr.mxu0 0.0
        %267 = vmatpush1.msra.mxu0 0.0
        %268 = vmatprep.subr.mxu0 0.0
        %269 = vmatpush1.msra.mxu0 0.0
        %270 = vmatprep.subr.mxu0 0.0
        %271 = vmatpush1.msra.mxu0 0.0
        %272 = vmatprep.subr.mxu0 0.0
        %273 = vmatpush1.msra.mxu0 0.0
        %274 = vmatprep.subr.mxu0 0.0
        %275 = vmatpush1.msra.mxu0 0.0
        %276 = vmatprep.mubr.f32.mxu0 0.0
        %277 = vmatmul.mubr.f32.gmra.mrb[0].mxu0 %v201
        %v278 = vpop.f32.mrb[0].mxu0
        %v279 = vadd.f32 %v182, %v278
        %v280 = vpop.f32.mrb[0].mxu0
        %v281 = vadd.f32 %v182, %v280
        %282 = vmatprep.mubr.f32.mxu0 0.0
        %283 = vmatmul.mubr.f32.gmra.mrb[0].mxu0 %v204
        %v284 = vpop.f32.mrb[0].mxu0
        %v285 = vadd.f32 %v187, %v284
        %v286 = vpop.f32.mrb[0].mxu0
        %v287 = vadd.f32 %v187, %v286
        %288 = vmatprep.mubr.f32.mxu0 0.0
        %289 = vmatmul.mubr.f32.gmra.mrb[0].mxu0 %v207
        %v290 = vpop.f32.mrb[0].mxu0
        %v291 = vadd.f32 %v192, %v290
        %v292 = vpop.f32.mrb[0].mxu0
        %v293 = vadd.f32 %v192, %v292
        %294 = vmatprep.mubr.f32.mxu0 0.0
        %295 = vmatmul.mubr.f32.gmra.mrb[0].mxu0 %v210
        %v296 = vpop.f32.mrb[0].mxu0
        %v297 = vadd.f32 %v197, %v296
        %v298 = vpop.f32.mrb[0].mxu0
        %v299 = vadd.f32 %v197, %v298
        %300 = vdwg.mxu0
        %v301 = vmax.f32 %v279, 0.0
        %v302 = vmax.f32 %v281, 0.0
        %v303 = vmax.f32 %v285, 0.0
        %v304 = vmax.f32 %v287, 0.0
        %v305 = vmax.f32 %v291, 0.0
        %v306 = vmax.f32 %v293, 0.0
        %v307 = vmax.f32 %v297, 0.0
        %v308 = vmax.f32 %v299, 0.0
        %309 = vst [vmem:[%s163] sm:$0xff] %v301
        %310 = vst [vmem:[%s163 + $0x8] sm:$0xff] %v302
        %311 = vst [vmem:[%s163 + $0x10] sm:$0xff] %v303
        %312 = vst [vmem:[%s163 + $0x18] sm:$0xff] %v304
        %313 = vst [vmem:[%s163 + $0x20] sm:$0xff] %v305
        %314 = vst [vmem:[%s163 + $0x28] sm:$0xff] %v306
        %315 = vst [vmem:[%s163 + $0x30] sm:$0xff] %v307
        %316 = vst [vmem:[%s163 + $0x38] sm:$0xff] %v308
        %s317 = sand.u32 %s93, 1
        %s318 = scalar_lea.sflag [#allocation3], %s317
        %s319 = sand.u32 %s93, 1
        %s320 = smul.addr %s319, 64
        %s321 = scalar_lea.vmem [#allocation2], %s320
        // Predicated region
        $region33: #{tpu_custom_call.1} parent=31 // pred_check
          %p322 = pneg %p103
        $region34: #{tpu_custom_call.1} parent=31 // pred_check_branch
          %324 = sbr.rel (%p322) target = $region36
        $region35: #{tpu_custom_call.1} parent=31 // pred_region
          %s326 = ssub.s32 1024, 1024
          %327 = vsyncadd %s318, %s326
          %s328 = smul.addr %s17, 8
          %s329 = smul.addr %s328, 128
          %s330 = scalar_lea.hbm %s3, %s329
          %s331 = sshll.u32 %s321, 4
          %s332 = int_to_ptr.vmem [resolvable:$true] %s331
          %337 = dma.vmem_to_hbm [thread:$0]  %s332, 1024, %s330, %s318, 256, 256, 16
        $region36: #{tpu_custom_call.1} parent=31 // pred_fallthru
          _
      $region32: #{tpu_custom_call.1} parent=5 // pred_fallthru
        _
      %p338 = scmp.le.s32.totalorder 2, %s12
      // Predicated region
      $region37: #{tpu_custom_call.1} parent=5 // pred_check
        %p339 = pneg %p338
      $region38: #{tpu_custom_call.1} parent=5 // pred_check_branch
        %341 = sbr.rel (%p339) target = $region40
      $region39: #{tpu_custom_call.1} parent=5 // pred_region
        %s342 = ssub.s32 %s12, 2
        // Predicated region
        $region41: #{tpu_custom_call.1} parent=39 // pred_check
          %p343 = pneg %p109
        $region42: #{tpu_custom_call.1} parent=39 // pred_check_branch
          %345 = sbr.rel (%p343) target = $region44
        $region43: #{tpu_custom_call.1} parent=39 // pred_region
          %s346 = sand.u32 %s94, 1
          %s347 = scalar_lea.sflag [#allocation3], %s346
          %s348 = sand.u32 %s94, 1
          %s349 = smul.addr %s348, 64
          %s350 = scalar_lea.vmem [#allocation2], %s349
          %351 = dma.done %s347, 1024
        $region44: #{tpu_custom_call.1} parent=39 // pred_fallthru
          _
      $region40: #{tpu_custom_call.1} parent=5 // pred_fallthru
        _
    $region6: #{tpu_custom_call.1} parent=1 // loop_footer
      %s16 = sadd.s32 1, %s12
    $region7: #{tpu_custom_call.1} parent=1 // loop_footer_branch
      %11 = sbr.rel target = $region3
    $region8: #{tpu_custom_call.1} parent=1 // loop_exit
      _
    %352 = vsyncpa [#allocation3], 1
    %s353 = scalar_lea.sflag [#allocation3], 1
    %354 = vsyncpa %s353, 1

</llo_original>
